<compile_context>
chip_gen: v7x
topology: tpu7x:2x2x1
jax: 0.10.0
libtpu: 0.0.40
codegen_flags: <defaults>
</compile_context>

<pallas_src>
import functools

import jax
import jax.numpy as jnp
from jax import lax
from jax.experimental import pallas as pl
from jax.experimental.pallas import tpu as pltpu

_LANE = 128
_MAX_TILE_S = 1024                 # >=512 lanes already ~85% of HBM roofline
_TARGET_BLOCK_BYTES = 4 * 1024 * 1024   # per-grid-step input block target


def _round_up(a, b):
    return ((a + b - 1) // b) * b


def _vmem_capacity_bytes():
    """Chip VMEM capacity, with a v7x-safe fallback (64 MiB per TC)."""
    try:
        info = pltpu.get_tpu_info()
        cap = getattr(info, "vmem_capacity_bytes", None)
        if cap:
            return int(cap)
    except Exception:
        pass
    return 64 * 1024 * 1024


def _inv_root(s, power):
    """s ** (-1/power), using cheap sqrt/rsqrt chains for integer powers of 2."""
    if isinstance(power, int) and power >= 2 and (power & (power - 1)) == 0:
        k = power.bit_length() - 1          # power = 2**k
        for _ in range(k - 1):
            s = jnp.sqrt(s)
        return lax.rsqrt(s)
    if power == 1:
        return pl.reciprocal(s, approx=False)
    return s ** (-1.0 / power)


def _normalize_kernel(x_ref, o_ref, *, power):
    # x_ref: (tile_n, C, tile_s) block in VMEM; reduction along C (axis=1) is
    # entirely in-block, so out-of-bounds tail columns never leak into valid ones.
    xf = x_ref[...].astype(jnp.float32)
    if power == 2:
        s = jnp.sum(xf * xf, axis=1, keepdims=True)
        inv = lax.rsqrt(s)
    else:
        if isinstance(power, int):
            xp = lax.integer_pow(xf, power)     # VPU multiply chain, no exp/log
        else:
            # float exponent matches torch's pow semantics (NaN for neg base)
            xp = xf ** power
        s = jnp.sum(xp, axis=1, keepdims=True)
        inv = _inv_root(s, power)
    o_ref[...] = (xf * inv).astype(o_ref.dtype)


def normalize(x, power=2, tile_s=None, tile_n=None):
    """x: (N, C, H, W). Returns x / (sum_c x**p)**(1/p), same shape/dtype."""
    N, C, H, W = x.shape
    S = H * W
    x3 = x.reshape(N, C, S)

    itemsize = jnp.dtype(x.dtype).itemsize
    min_sublane = max(8, 32 // itemsize)        # f32:8, bf16:16, int8/fp8:32
    c_pad_in = _round_up(C, min_sublane)        # VMEM sublane footprint (input dtype)
    c_pad_f32 = _round_up(C, 8)                 # f32 temporaries

    vmem_cap = _vmem_capacity_bytes()
    vmem_budget = vmem_cap // 2                 # v7x: ~32 MiB, v5e/v6e: ~64 MiB
    vmem_limit = (vmem_cap * 3) // 4            # raise scoped-VMEM default

    # --- spatial tile: lane-aligned, pick the multiple of 128 (<= cap) that
    #     minimizes last-block waste; S <= 128 uses the full dim (exempt).
    if tile_s is None:
        if S <= _LANE:
            tile_s = S
        else:
            cap = min(_round_up(S, _LANE), _MAX_TILE_S)
            best_key, best_ts = None, _LANE
            for ts in range(_LANE, cap + 1, _LANE):
                waste = pl.cdiv(S, ts) * ts - S
                key = (waste, -ts)              # min waste, then largest tile
                if best_key is None or key < best_key:
                    best_key, best_ts = key, ts
            tile_s = best_ts

    # --- batch tile: target ~4 MiB of input per grid step, clamped by the
    #     (sublane-padding-aware) VMEM budget.  tile_n need not divide N.
    if tile_n is None:
        per_n_hbm = max(1, C * tile_s * itemsize)
        tile_n = max(1, min(N, _TARGET_BLOCK_BYTES // per_n_hbm))
        # 2x double-buffered (in + out) blocks + ~3 f32 temporaries per row.
        per_n_vmem = tile_s * (2 * 2 * c_pad_in * itemsize + 3 * c_pad_f32 * 4)
        vmem_cap_n = max(1, vmem_budget // max(1, per_n_vmem))
        tile_n = max(1, min(tile_n, vmem_cap_n, N))

    grid = (pl.cdiv(N, tile_n), pl.cdiv(S, tile_s))

    kernel = functools.partial(_normalize_kernel, power=power)

    out3 = pl.pallas_call(
        kernel,
        out_shape=jax.ShapeDtypeStruct((N, C, S), x.dtype),
        grid_spec=pltpu.PrefetchScalarGridSpec(
            num_scalar_prefetch=0,
            grid=grid,
            in_specs=[pl.BlockSpec((tile_n, C, tile_s), lambda i, j: (i, 0, j))],
            out_specs=pl.BlockSpec((tile_n, C, tile_s), lambda i, j: (i, 0, j)),
        ),
        compiler_params=pltpu.CompilerParams(
            dimension_semantics=("parallel", "parallel"),
            vmem_limit_bytes=int(vmem_limit),
        ),
    )(x3)

    return out3.reshape(N, C, H, W)


if __name__ == "__main__":
    key = jax.random.PRNGKey(0)
    # small NCHW input consistent with typical use of Normalize
    x = jax.random.normal(key, (2, 4, 16, 16), dtype=jnp.float32)
    out = jax.block_until_ready(normalize(x, power=2))
    norm_ref = jnp.sum(x ** 2, axis=1, keepdims=True) ** 0.5
    ref = x / norm_ref
    assert out.shape == x.shape and out.dtype == x.dtype
    assert jnp.allclose(out, ref, atol=2e-5, rtol=2e-5)

    # general-p path, small spatial (S < 128 -> full-dim spatial block)
    x2 = jax.random.normal(jax.random.PRNGKey(1), (2, 4, 6, 10), dtype=jnp.float32)
    out2 = jax.block_until_ready(normalize(x2, power=4))
    norm2 = jnp.sum(x2 ** 4, axis=1, keepdims=True) ** 0.25
    assert jnp.allclose(out2, x2 / norm2, atol=2e-5, rtol=2e-5)

    # boundary-masked spatial tail (S=135 not a multiple of tile_s=128)
    x3 = jax.random.normal(jax.random.PRNGKey(2), (3, 4, 9, 15), dtype=jnp.float32)
    out3 = jax.block_until_ready(normalize(x3, power=2))
    norm3 = jnp.sum(x3 ** 2, axis=1, keepdims=True) ** 0.5
    assert jnp.allclose(out3, x3 / norm3, atol=2e-5, rtol=2e-5)

    print("KERNEL_OK")
</pallas_src>

<mosaic_0001>
module attributes {stable_mosaic.version = 11 : i64} {
  func.func @_normalize_kernel(%arg0: i32, %arg1: i32, %arg2: memref<2x4x256xf32, #tpu.memory_space<vmem>>, %arg3: memref<2x4x256xf32, #tpu.memory_space<vmem>>) attributes {dimension_semantics = [#tpu.dimension_semantics<parallel>, #tpu.dimension_semantics<parallel>], iteration_bounds = array<i64: 1, 1>, scalar_prefetch = 0 : i64, scratch_operands = 0 : i64, tpu.core_type = #tpu.core_type<tc>, window_params = [{transform_indices = @transform_0, window_bounds = array<i64: 2, 4, 256>}, {transform_indices = @transform_1, window_bounds = array<i64: 2, 4, 256>}]} {
    %c0 = arith.constant 0 : index
    %c0_0 = arith.constant 0 : index
    %c0_1 = arith.constant 0 : index
    %0 = vector.load %arg2[%c0, %c0_0, %c0_1] : memref<2x4x256xf32, #tpu.memory_space<vmem>>, vector<2x4x256xf32>
    %1 = arith.mulf %0, %0 : vector<2x4x256xf32>
    %cst = arith.constant dense<0.000000e+00> : vector<2x256xf32>
    %2 = vector.multi_reduction <add>, %1, %cst [1] : vector<2x4x256xf32> to vector<2x256xf32>
    %3 = vector.shape_cast %2 : vector<2x256xf32> to vector<2x1x256xf32>
    %4 = math.rsqrt %3 : vector<2x1x256xf32>
    %5 = vector.broadcast %4 : vector<2x1x256xf32> to vector<2x4x256xf32>
    %6 = arith.mulf %0, %5 : vector<2x4x256xf32>
    %c0_2 = arith.constant 0 : index
    %c0_3 = arith.constant 0 : index
    %c0_4 = arith.constant 0 : index
    %7 = vector.load %arg3[%c0_2, %c0_3, %c0_4] : memref<2x4x256xf32, #tpu.memory_space<vmem>>, vector<2x4x256xf32>
    tpu.vector_store %arg3[%c0_2, %c0_3, %c0_4], %6 {strides = array<i32>} : memref<2x4x256xf32, #tpu.memory_space<vmem>>, vector<2x4x256xf32>,
    return
  }
  func.func @transform_0(%arg0: i32, %arg1: i32) -> (i32, i32, i32) {
    %c0_i32 = arith.constant 0 : i32
    %c0_i32_0 = arith.constant 0 : i32
    return %arg0, %c0_i32, %arg1 : i32, i32, i32
  }
  func.func @transform_1(%arg0: i32, %arg1: i32) -> (i32, i32, i32) {
    %c0_i32 = arith.constant 0 : i32
    %c0_i32_0 = arith.constant 0 : i32
    return %arg0, %c0_i32, %arg1 : i32, i32, i32
  }
}

</mosaic_0001>

<llo_original>
// kernel: tpu_custom_call.1
$region0: #{tpu_custom_call.1}
  #allocation0 [shape = 'u32[]', space=smem, size = 0x4, offset = 0x4, fixed_abs, tag = 'smem constant byte address 0x4 - core index']
  #allocation1 [shape = 'u32[144,128]{1,0:T(1,128)}', space=vmem, size = 0x12000, scoped, tag = 'internal scratch']
  %s0 = inlined_call_operand.hbm [shape: f32[2,4,256], index: 0, kind: input, shape index: {}]
  %s1 = inlined_call_operand.hbm [shape: f32[2,4,256], index: 1, kind: output, shape index: {}]
  %s2 = sld [smem:[#allocation0]]
  $region18: #{tpu_custom_call.1} parent=0
    _
  %s4 = ssub.s32 1, %s2
  %s5 = scalar_select 0, %s4, %s2
  $region1: #{tpu_custom_call.1} parent=0
    #allocation2 [shape = 'u8[8192]{0}', space=vmem, size = 0x2000, scoped, tag = 'input window, operand 0, single buffered']
    #allocation3 [shape = 's32[1]{0}', space=sflag, size = 0x4, scoped, tag = 'scoped memory for tpu_custom_call.1']
    #allocation4 [shape = 's32[1]{0}', space=sflag, size = 0x4, scoped, tag = 'scoped memory for tpu_custom_call.1']
    #allocation5 [shape = 'u8[8192]{0}', space=vmem, size = 0x2000, scoped, tag = 'output window, operand 0, single buffered']
    %6 = vsyncpa [#allocation3], 0
    %7 = vsyncpa [#allocation4], 0
    // Predicated region
    $region2: #{tpu_custom_call.1} parent=1 // pred_check
      _
    $region3: #{tpu_custom_call.1} parent=1 // pred_check_branch
      %9 = sbr.rel (0) target = $region5
    $region4: #{tpu_custom_call.1} parent=1 // pred_region
      %s11 = ssub.s32 256, 256
      %12 = vsyncadd [#allocation3], %s11
      %s13 = sshll.u32 [#allocation2], 4
      %s14 = int_to_ptr.vmem [resolvable:$true] %s13
      %19 = dma.hbm_to_vmem [thread:$0]  %s0, 256, %s14, [#allocation3], 128, 128, 8
    $region5: #{tpu_custom_call.1} parent=1 // pred_fallthru
      _
    // Predicated region
    $region6: #{tpu_custom_call.1} parent=1 // pred_check
      _
    $region7: #{tpu_custom_call.1} parent=1 // pred_check_branch
      %21 = sbr.rel (0) target = $region9
    $region8: #{tpu_custom_call.1} parent=1 // pred_region
      %22 = dma.done [#allocation3], 256
    $region9: #{tpu_custom_call.1} parent=1 // pred_fallthru
      _
    %v23 = vld [vmem:[#allocation2] sm:$0xff]
    %v24 = vld [vmem:[#allocation2 + $0x8] sm:$0xff]
    %v25 = vmul.f32 %v23, %v23
    %v26 = vmul.f32 %v24, %v24
    %v29 = vcombine.high %v25, %v25
    %v30 = vcombine.high %v26, %v26
    %vm33 = vcmask 1043456
    %v34 = vsel %vm33, %v25, 0.0
    %v35 = vrot.slane %v34, 4
    %v36 = vadd.f32 %v34, %v35
    %v37 = vrot.slane %v36, 2
    %v38 = vadd.f32 %v36, %v37
    %v39 = vrot.slane %v38, 1
    %v40 = vadd.f32 %v38, %v39
    %v41 = vsel %vm33, %v29, 0.0
    %v42 = vrot.slane %v41, 4
    %v43 = vadd.f32 %v41, %v42
    %v44 = vrot.slane %v43, 2
    %v45 = vadd.f32 %v43, %v44
    %v46 = vrot.slane %v45, 1
    %v47 = vadd.f32 %v45, %v46
    %v48 = vsel %vm33, %v26, 0.0
    %v49 = vrot.slane %v48, 4
    %v50 = vadd.f32 %v48, %v49
    %v51 = vrot.slane %v50, 2
    %v52 = vadd.f32 %v50, %v51
    %v53 = vrot.slane %v52, 1
    %v54 = vadd.f32 %v52, %v53
    %v55 = vsel %vm33, %v30, 0.0
    %v56 = vrot.slane %v55, 4
    %v57 = vadd.f32 %v55, %v56
    %v58 = vrot.slane %v57, 2
    %v59 = vadd.f32 %v57, %v58
    %v60 = vrot.slane %v59, 1
    %v61 = vadd.f32 %v59, %v60
    %v62 = vrsqrt.pop %v40
    %v63 = vrsqrt.pop %v47
    %v64 = vrsqrt.pop %v54
    %v65 = vrsqrt.pop %v61
    %v70 = vcombine.low %v62, %v63
    %v71 = vcombine.low %v64, %v65
    %v74 = vmul.f32 %v23, %v70
    %v75 = vmul.f32 %v24, %v71
    %76 = vst [vmem:[#allocation5] sm:$0xff] %v74
    %77 = vst [vmem:[#allocation5 + $0x8] sm:$0xff] %v75
    // Predicated region
    $region10: #{tpu_custom_call.1} parent=1 // pred_check
      _
    $region11: #{tpu_custom_call.1} parent=1 // pred_check_branch
      %79 = sbr.rel (0) target = $region13
    $region12: #{tpu_custom_call.1} parent=1 // pred_region
      %s81 = ssub.s32 256, 256
      %82 = vsyncadd [#allocation4], %s81
      %s83 = sshll.u32 [#allocation5], 4
      %s84 = int_to_ptr.vmem [resolvable:$true] %s83
      %89 = dma.vmem_to_hbm [thread:$0]  %s84, 256, %s1, [#allocation4], 128, 128, 8
    $region13: #{tpu_custom_call.1} parent=1 // pred_fallthru
      _
    // Predicated region
    $region14: #{tpu_custom_call.1} parent=1 // pred_check
      _
    $region15: #{tpu_custom_call.1} parent=1 // pred_check_branch
      %91 = sbr.rel (0) target = $region17
    $region16: #{tpu_custom_call.1} parent=1 // pred_region
      %92 = dma.done [#allocation4], 256
    $region17: #{tpu_custom_call.1} parent=1 // pred_fallthru
      _
    %93 = vsyncpa [#allocation3], 1
    %94 = vsyncpa [#allocation4], 1

</llo_original>
